<compile_context>
chip_gen: v5e
topology: v5e:2x2
jax: 0.10.0
libtpu: 0.0.40
codegen_flags: <defaults>
</compile_context>

<pallas_src>
import math

import jax
import jax.numpy as jnp
from jax import lax
from jax.experimental import pallas as pl
from jax.experimental.pallas import tpu as pltpu


def _make_mlp_kernel(n_layers):
    """Kernel for (Linear, ReLU) * (n_layers-1) followed by Linear(H, 1).

    refs = [x_ref, w0, b0, w1, b1, ..., w_last(1,H), b_last(1,1), out_ref(1,TB)]
    """

    def kernel(*refs):
        x_ref = refs[0]
        o_ref = refs[-1]
        h = x_ref[...]  # (TB, obs_dim); no redundant f32 cast

        # Hidden layers: single pre-MXU cast to the weight dtype (bf16), f32
        # accumulation, bias-add + ReLU kept in f32 (v5e has no bf16 VPU).
        for li in range(n_layers - 1):
            w = refs[1 + 2 * li][...]                      # (in, out), bf16
            b = refs[2 + 2 * li][...]                      # (1, out), f32
            h = jnp.dot(h.astype(w.dtype), w,
                        preferred_element_type=jnp.float32) + b
            h = jnp.maximum(h, 0.0)

        # Final Linear(H, 1) emitted lane-dense: contract H between
        # w_last (1, H) and h (TB, H) -> (1, TB)  (batch on the lane axis).
        w_last = refs[1 + 2 * (n_layers - 1)][...]          # (1, H), f32
        b_last = refs[2 + 2 * (n_layers - 1)][...]          # (1, 1), f32
        out = lax.dot_general(
            w_last, h,
            dimension_numbers=(((1,), (1,)), ((), ())),
            preferred_element_type=jnp.float32) + b_last    # (1, TB)
        o_ref[...] = out.astype(o_ref.dtype)

    return kernel


def _round_up(x, m):
    return ((x + m - 1) // m) * m


def _default_vmem_budget_bytes():
    """Per-generation VMEM budget (v5e/v6e: ~77 MiB, v7x: ~38 MiB)."""
    try:
        cap = int(pltpu.get_tpu_info().vmem_capacity_bytes)
    except Exception:
        cap = 64 * 1024 * 1024  # conservative fallback (v7x physical)
    return max(16 * 1024 * 1024, min(int(cap * 0.6), 96 * 1024 * 1024))


def _choose_block_rows(B, obs_dim, params, requested, vmem_budget_bytes):
    """Pick a batch tile that fits the VMEM budget and keeps the grid useful."""
    # Weights/biases are single-buffered (pl.Buffered(1)) and resident.
    weight_bytes = sum(int(w.size) * w.dtype.itemsize + int(b.size) * b.dtype.itemsize
                       for w, b in params)
    widest = max([obs_dim] + [int(w.shape[1]) for w, _ in params[:-1]])
    # Per-row VMEM: double-buffered f32 obs tile, double-buffered f32 lane-dense
    # output row, plus two live (f32 + bf16) copies of the widest activation
    # from the statically-unrolled layer loop.
    per_row = 2 * obs_dim * 4 + 2 * 4 + widest * (4 + 2) * 2
    cap = (vmem_budget_bytes - weight_bytes) // max(per_row, 1)
    tb = max(16, min(int(requested), int(cap)))

    if B <= tb and B <= 1024:
        return B  # whole batch in one full-extent tile (legal block shape)

    # Large B: 256-aligned tile (MXU M on v6e/v7x; also 128-aligned for v5e),
    # capped so the grid has multiple steps (megacore sharding on v7x).
    tb = min(tb, _round_up(pl.cdiv(B, 4), 256))
    tb = (tb // 256) * 256 if tb >= 256 else 128
    return max(128, min(tb, _round_up(B, 128)))


def value_network_forward(obs, params, *, block_rows=1024, vmem_budget_bytes=None):
    """obs: (B, obs_dim) f32 (bf16 accepted directly, no wrapper cast).
    params: [(W0(in,out) bf16, b0(1,out) f32), ..., (W_last(1,H) f32, b_last(1,1) f32)]
    Returns (B,) f32, matching `self.net(obs).squeeze(-1)`.
    """
    B, obs_dim = obs.shape
    n_layers = len(params)
    if vmem_budget_bytes is None:
        vmem_budget_bytes = _default_vmem_budget_bytes()

    tb = _choose_block_rows(B, obs_dim, params, block_rows, vmem_budget_bytes)
    grid = (pl.cdiv(B, tb),)
    kernel = _make_mlp_kernel(n_layers)

    flat_inputs = [obs]
    in_specs = [pl.BlockSpec((tb, obs_dim), lambda i: (i, 0))]
    for w, b in params:
        flat_inputs.append(w)
        flat_inputs.append(b)
        # Constant index map -> resident across grid steps; single buffer so
        # weight VMEM is not pointlessly doubled by the pipeliner.
        in_specs.append(pl.BlockSpec(w.shape, lambda i: (0, 0),
                                     pipeline_mode=pl.Buffered(1)))
        in_specs.append(pl.BlockSpec(b.shape, lambda i: (0, 0),
                                     pipeline_mode=pl.Buffered(1)))

    out = pl.pallas_call(
        kernel,
        out_shape=jax.ShapeDtypeStruct((1, B), jnp.float32),   # lane-dense output
        grid=grid,
        in_specs=in_specs,
        out_specs=pl.BlockSpec((1, tb), lambda i: (0, i)),
        compiler_params=pltpu.CompilerParams(
            dimension_semantics=("parallel",),            # megacore on v7x
            vmem_limit_bytes=int(vmem_budget_bytes)),
    )(*flat_inputs)

    return out[0]  # (B,) == net(obs).squeeze(-1)


def init_value_network_params(key, obs_dim, hidden_sizes, weight_dtype=jnp.bfloat16):
    """PyTorch nn.Linear-style init (U(-1/sqrt(fan_in), +)), packed for the kernel.

    Hidden weights: (in, out) in `weight_dtype` (bf16 MXU fast path); biases
    (1, out) f32. Final (H -> 1) weight stored as a lane-dense (1, H) f32 row.
    """
    sizes = [obs_dim] + list(hidden_sizes)
    params = []
    for fan_in, fan_out in zip(sizes[:-1], sizes[1:]):
        key, kw, kb = jax.random.split(key, 3)
        bound = 1.0 / math.sqrt(fan_in)
        w = jax.random.uniform(kw, (fan_in, fan_out), jnp.float32, -bound, bound)
        b = jax.random.uniform(kb, (1, fan_out), jnp.float32, -bound, bound)
        params.append((w.astype(weight_dtype), b))
    fan_in = hidden_sizes[-1]
    key, kw, kb = jax.random.split(key, 3)
    bound = 1.0 / math.sqrt(fan_in)
    w_last = jax.random.uniform(kw, (1, fan_in), jnp.float32, -bound, bound)
    b_last = jax.random.uniform(kb, (1, 1), jnp.float32, -bound, bound)
    params.append((w_last, b_last))
    return params


def reference_forward(obs, params):
    """Pure-JAX reference mirroring the kernel's dtype semantics."""
    h = obs.astype(jnp.float32)
    for w, b in params[:-1]:
        h = jnp.dot(h.astype(w.dtype).astype(jnp.float32),
                    w.astype(jnp.float32)) + b.astype(jnp.float32)
        h = jnp.maximum(h, 0.0)
    w_last, b_last = params[-1]
    return jnp.sum(h * w_last[0].astype(jnp.float32), axis=-1) + b_last[0, 0]


if __name__ == "__main__":
    key = jax.random.PRNGKey(0)

    batch = 2
    obs_dim = 16
    hidden_sizes = [32, 32]

    key, k_obs = jax.random.split(key)
    obs = jax.random.normal(k_obs, (batch, obs_dim), dtype=jnp.float32)
    params = init_value_network_params(key, obs_dim, hidden_sizes)

    # Small-shape check (single full-extent tile).
    out = jax.block_until_ready(value_network_forward(obs, params))
    ref = jax.block_until_ready(reference_forward(obs, params))
    assert out.shape == (batch,), out.shape
    assert jnp.allclose(out, ref, atol=2e-3, rtol=2e-3), (out, ref)

    # Tiled/grid path: multiple lane-dense output tiles + ragged last tile.
    obs_big = jax.random.normal(jax.random.PRNGKey(1), (1040, obs_dim),
                                dtype=jnp.float32)
    out_big = jax.block_until_ready(value_network_forward(obs_big, params))
    ref_big = jax.block_until_ready(reference_forward(obs_big, params))
    assert out_big.shape == (1040,), out_big.shape
    assert jnp.allclose(out_big, ref_big, atol=2e-3, rtol=2e-3)

    print("KERNEL_OK")
</pallas_src>

<mosaic_0001>
module attributes {stable_mosaic.version = 11 : i64} {
  func.func @kernel(%arg0: i32, %arg1: memref<2x16xf32, #tpu.memory_space<vmem>>, %arg2: memref<16x32xbf16, #tpu.memory_space<vmem>>, %arg3: memref<1x32xf32, #tpu.memory_space<vmem>>, %arg4: memref<32x32xbf16, #tpu.memory_space<vmem>>, %arg5: memref<1x32xf32, #tpu.memory_space<vmem>>, %arg6: memref<1x32xf32, #tpu.memory_space<vmem>>, %arg7: memref<1x1xf32, #tpu.memory_space<vmem>>, %arg8: memref<1x2xf32, #tpu.memory_space<vmem>>) attributes {dimension_semantics = [#tpu.dimension_semantics<parallel>], iteration_bounds = array<i64: 1>, scalar_prefetch = 0 : i64, scratch_operands = 0 : i64, tpu.core_type = #tpu.core_type<tc>, window_params = [{transform_indices = @transform_0, window_bounds = array<i64: 2, 16>}, {pipeline_mode = #tpu.pipeline_mode<synchronous>, transform_indices = @transform_1, window_bounds = array<i64: 16, 32>}, {pipeline_mode = #tpu.pipeline_mode<synchronous>, transform_indices = @transform_2, window_bounds = array<i64: 1, 32>}, {pipeline_mode = #tpu.pipeline_mode<synchronous>, transform_indices = @transform_3, window_bounds = array<i64: 32, 32>}, {pipeline_mode = #tpu.pipeline_mode<synchronous>, transform_indices = @transform_4, window_bounds = array<i64: 1, 32>}, {pipeline_mode = #tpu.pipeline_mode<synchronous>, transform_indices = @transform_5, window_bounds = array<i64: 1, 32>}, {pipeline_mode = #tpu.pipeline_mode<synchronous>, transform_indices = @transform_6, window_bounds = array<i64: 1, 1>}, {transform_indices = @transform_7, window_bounds = array<i64: 1, 2>}]} {
    %c0 = arith.constant 0 : index
    %c0_0 = arith.constant 0 : index
    %0 = vector.load %arg1[%c0, %c0_0] : memref<2x16xf32, #tpu.memory_space<vmem>>, vector<2x16xf32>
    %c0_1 = arith.constant 0 : index
    %c0_2 = arith.constant 0 : index
    %1 = vector.load %arg2[%c0_1, %c0_2] : memref<16x32xbf16, #tpu.memory_space<vmem>>, vector<16x32xbf16>
    %c0_3 = arith.constant 0 : index
    %c0_4 = arith.constant 0 : index
    %2 = vector.load %arg3[%c0_3, %c0_4] : memref<1x32xf32, #tpu.memory_space<vmem>>, vector<1x32xf32>
    %3 = arith.truncf %0 : vector<2x16xf32> to vector<2x16xbf16>
    %cst = arith.constant dense<0.000000e+00> : vector<2x32xf32>
    %4 = tpu.matmul %3, %1, %cst {dimension_numbers = #tpu.dot_dimension_numbers<[1], [0], [0], [1], [0, 0, 1, 1], [], []>} : vector<2x16xbf16>, vector<16x32xbf16>, vector<2x32xf32> -> vector<2x32xf32>
    %5 = vector.broadcast %2 : vector<1x32xf32> to vector<2x32xf32>
    %6 = arith.addf %4, %5 : vector<2x32xf32>
    %cst_5 = arith.constant 0.000000e+00 : f32
    %7 = vector.broadcast %cst_5 : f32 to vector<2x32xf32>
    %8 = arith.maximumf %6, %7 : vector<2x32xf32>
    %c0_6 = arith.constant 0 : index
    %c0_7 = arith.constant 0 : index
    %9 = vector.load %arg4[%c0_6, %c0_7] : memref<32x32xbf16, #tpu.memory_space<vmem>>, vector<32x32xbf16>
    %c0_8 = arith.constant 0 : index
    %c0_9 = arith.constant 0 : index
    %10 = vector.load %arg5[%c0_8, %c0_9] : memref<1x32xf32, #tpu.memory_space<vmem>>, vector<1x32xf32>
    %11 = arith.truncf %8 : vector<2x32xf32> to vector<2x32xbf16>
    %cst_10 = arith.constant dense<0.000000e+00> : vector<2x32xf32>
    %12 = tpu.matmul %11, %9, %cst_10 {dimension_numbers = #tpu.dot_dimension_numbers<[1], [0], [0], [1], [0, 0, 1, 1], [], []>} : vector<2x32xbf16>, vector<32x32xbf16>, vector<2x32xf32> -> vector<2x32xf32>
    %13 = vector.broadcast %10 : vector<1x32xf32> to vector<2x32xf32>
    %14 = arith.addf %12, %13 : vector<2x32xf32>
    %cst_11 = arith.constant 0.000000e+00 : f32
    %15 = vector.broadcast %cst_11 : f32 to vector<2x32xf32>
    %16 = arith.maximumf %14, %15 : vector<2x32xf32>
    %c0_12 = arith.constant 0 : index
    %c0_13 = arith.constant 0 : index
    %17 = vector.load %arg6[%c0_12, %c0_13] : memref<1x32xf32, #tpu.memory_space<vmem>>, vector<1x32xf32>
    %c0_14 = arith.constant 0 : index
    %c0_15 = arith.constant 0 : index
    %18 = vector.load %arg7[%c0_14, %c0_15] : memref<1x1xf32, #tpu.memory_space<vmem>>, vector<1x1xf32>
    %cst_16 = arith.constant dense<0.000000e+00> : vector<1x2xf32>
    %19 = tpu.matmul %17, %16, %cst_16 {dimension_numbers = #tpu.dot_dimension_numbers<[1], [1], [0], [0], [0, 0, 1, 0], [], []>} : vector<1x32xf32>, vector<2x32xf32>, vector<1x2xf32> -> vector<1x2xf32>
    %20 = vector.broadcast %18 : vector<1x1xf32> to vector<1x2xf32>
    %21 = arith.addf %19, %20 : vector<1x2xf32>
    %c0_17 = arith.constant 0 : index
    %c0_18 = arith.constant 0 : index
    %22 = vector.load %arg8[%c0_17, %c0_18] : memref<1x2xf32, #tpu.memory_space<vmem>>, vector<1x2xf32>
    tpu.vector_store %arg8[%c0_17, %c0_18], %21 {strides = array<i32>} : memref<1x2xf32, #tpu.memory_space<vmem>>, vector<1x2xf32>,
    return
  }
  func.func @transform_0(%arg0: i32) -> (i32, i32) {
    %c0_i32 = arith.constant 0 : i32
    %c0_i32_0 = arith.constant 0 : i32
    return %arg0, %c0_i32 : i32, i32
  }
  func.func @transform_1(%arg0: i32) -> (i32, i32) {
    %c0_i32 = arith.constant 0 : i32
    %c0_i32_0 = arith.constant 0 : i32
    %c0_i32_1 = arith.constant 0 : i32
    return %c0_i32, %c0_i32_0 : i32, i32
  }
  func.func @transform_2(%arg0: i32) -> (i32, i32) {
    %c0_i32 = arith.constant 0 : i32
    %c0_i32_0 = arith.constant 0 : i32
    %c0_i32_1 = arith.constant 0 : i32
    return %c0_i32, %c0_i32_0 : i32, i32
  }
  func.func @transform_3(%arg0: i32) -> (i32, i32) {
    %c0_i32 = arith.constant 0 : i32
    %c0_i32_0 = arith.constant 0 : i32
    %c0_i32_1 = arith.constant 0 : i32
    return %c0_i32, %c0_i32_0 : i32, i32
  }
  func.func @transform_4(%arg0: i32) -> (i32, i32) {
    %c0_i32 = arith.constant 0 : i32
    %c0_i32_0 = arith.constant 0 : i32
    %c0_i32_1 = arith.constant 0 : i32
    return %c0_i32, %c0_i32_0 : i32, i32
  }
  func.func @transform_5(%arg0: i32) -> (i32, i32) {
    %c0_i32 = arith.constant 0 : i32
    %c0_i32_0 = arith.constant 0 : i32
    %c0_i32_1 = arith.constant 0 : i32
    return %c0_i32, %c0_i32_0 : i32, i32
  }
  func.func @transform_6(%arg0: i32) -> (i32, i32) {
    %c0_i32 = arith.constant 0 : i32
    %c0_i32_0 = arith.constant 0 : i32
    %c0_i32_1 = arith.constant 0 : i32
    return %c0_i32, %c0_i32_0 : i32, i32
  }
  func.func @transform_7(%arg0: i32) -> (i32, i32) {
    %c0_i32 = arith.constant 0 : i32
    %c0_i32_0 = arith.constant 0 : i32
    return %c0_i32, %arg0 : i32, i32
  }
}

</mosaic_0001>

<llo_original>
// kernel: tpu_custom_call.1
$region0: #{tpu_custom_call.1}
  #allocation0 [shape = 'u32[]', space=smem, size = 0x4, offset = 0x4, fixed_abs, tag = 'smem constant byte address 0x4 - core index']
  #allocation1 [shape = 'u32[72,128]{1,0:T(1,128)}', space=vmem, size = 0x9000, scoped, tag = 'internal scratch']
  #allocation2 [shape = 'f32[1,1]{1,0:T(1,128)S(1)}', space=vmem, size = 0x200, scoped, tag = 'scoped memory for tpu_custom_call.1']
  %s0 = inlined_call_operand.vmem [shape: f32[2,16], index: 0, kind: input, shape index: {}]
  %s1 = inlined_call_operand.hbm [shape: bf16[16,32], index: 1, kind: input, shape index: {}]
  %s2 = inlined_call_operand.vmem [shape: f32[1,32], index: 2, kind: input, shape index: {}]
  %s3 = inlined_call_operand.hbm [shape: bf16[32,32], index: 3, kind: input, shape index: {}]
  %s4 = inlined_call_operand.vmem [shape: f32[1,32], index: 4, kind: input, shape index: {}]
  %s5 = inlined_call_operand.vmem [shape: f32[1,32], index: 5, kind: input, shape index: {}]
  %s6 = inlined_call_operand.<no memory space> [shape: f32[1,1], index: 6, kind: input, shape index: {}]
  %s7 = inlined_call_operand.hbm [shape: f32[1,2], index: 7, kind: output, shape index: {}]
  %s8 = sld [smem:[#allocation0]]
  $region46: #{tpu_custom_call.1} parent=0
    _
  %s10 = ssub.s32 1, %s8
  %s11 = scalar_select 0, %s10, %s8
  %v12 = vstv %s6
  %13 = vst [vmem:[#allocation2] sm:$0x1] %v12
  $region1: #{tpu_custom_call.1} parent=0
    #allocation3 [shape = 'u8[4096]{0}', space=vmem, size = 0x1000, scoped, tag = 'input window, operand 1, single buffered']
    #allocation4 [shape = 's32[1]{0}', space=sflag, size = 0x4, scoped, tag = 'scoped memory for tpu_custom_call.1']
    #allocation5 [shape = 's32[1]{0}', space=sflag, size = 0x4, scoped, tag = 'scoped memory for tpu_custom_call.1']
    #allocation6 [shape = 'u8[8192]{0}', space=vmem, size = 0x2000, scoped, tag = 'input window, operand 3, single buffered']
    #allocation7 [shape = 's32[1]{0}', space=sflag, size = 0x4, scoped, tag = 'scoped memory for tpu_custom_call.1']
    #allocation8 [shape = 'u8[512]{0}', space=vmem, size = 0x400, scoped, tag = 'output window, operand 0, single buffered']
    %14 = vsyncpa [#allocation4], 0
    %15 = vsyncpa [#allocation7], 0
    %16 = vsyncpa [#allocation5], 0
    // Predicated region
    $region2: #{tpu_custom_call.1} parent=1 // pred_check
      _
    $region3: #{tpu_custom_call.1} parent=1 // pred_check_branch
      %18 = sbr.rel (0) target = $region5
    $region4: #{tpu_custom_call.1} parent=1 // pred_region
      _
    $region5: #{tpu_custom_call.1} parent=1 // pred_fallthru
      _
    // Predicated region
    $region6: #{tpu_custom_call.1} parent=1 // pred_check
      _
    $region7: #{tpu_custom_call.1} parent=1 // pred_check_branch
      %20 = sbr.rel (0) target = $region9
    $region8: #{tpu_custom_call.1} parent=1 // pred_region
      %22 = vsyncadd [#allocation4], 0
      %s23 = sshll.u32 %s1, 4
      %s24 = int_to_ptr.hbm [resolvable:$true] %s23
      %s25 = sshll.u32 [#allocation3], 4
      %s26 = int_to_ptr.vmem [resolvable:$true] %s25
      %31 = dma.hbm_to_vmem [thread:$0]  %s24, 128, %s26, [#allocation4], 64, 64, 4
    $region9: #{tpu_custom_call.1} parent=1 // pred_fallthru
      _
    // Predicated region
    $region10: #{tpu_custom_call.1} parent=1 // pred_check
      _
    $region11: #{tpu_custom_call.1} parent=1 // pred_check_branch
      %33 = sbr.rel (0) target = $region13
    $region12: #{tpu_custom_call.1} parent=1 // pred_region
      _
    $region13: #{tpu_custom_call.1} parent=1 // pred_fallthru
      _
    // Predicated region
    $region14: #{tpu_custom_call.1} parent=1 // pred_check
      _
    $region15: #{tpu_custom_call.1} parent=1 // pred_check_branch
      %35 = sbr.rel (0) target = $region17
    $region16: #{tpu_custom_call.1} parent=1 // pred_region
      %37 = vsyncadd [#allocation7], 0
      %s38 = sshll.u32 %s3, 4
      %s39 = int_to_ptr.hbm [resolvable:$true] %s38
      %s40 = sshll.u32 [#allocation6], 4
      %s41 = int_to_ptr.vmem [resolvable:$true] %s40
      %46 = dma.hbm_to_vmem [thread:$0]  %s39, 256, %s41, [#allocation7], 64, 64, 4
    $region17: #{tpu_custom_call.1} parent=1 // pred_fallthru
      _
    // Predicated region
    $region18: #{tpu_custom_call.1} parent=1 // pred_check
      _
    $region19: #{tpu_custom_call.1} parent=1 // pred_check_branch
      %48 = sbr.rel (0) target = $region21
    $region20: #{tpu_custom_call.1} parent=1 // pred_region
      _
    $region21: #{tpu_custom_call.1} parent=1 // pred_fallthru
      _
    // Predicated region
    $region22: #{tpu_custom_call.1} parent=1 // pred_check
      _
    $region23: #{tpu_custom_call.1} parent=1 // pred_check_branch
      %50 = sbr.rel (0) target = $region25
    $region24: #{tpu_custom_call.1} parent=1 // pred_region
      _
    $region25: #{tpu_custom_call.1} parent=1 // pred_fallthru
      _
    // Predicated region
    $region26: #{tpu_custom_call.1} parent=1 // pred_check
      _
    $region27: #{tpu_custom_call.1} parent=1 // pred_check_branch
      %52 = sbr.rel (0) target = $region29
    $region28: #{tpu_custom_call.1} parent=1 // pred_region
      _
    $region29: #{tpu_custom_call.1} parent=1 // pred_fallthru
      _
    // Predicated region
    $region30: #{tpu_custom_call.1} parent=1 // pred_check
      _
    $region31: #{tpu_custom_call.1} parent=1 // pred_check_branch
      %54 = sbr.rel (0) target = $region33
    $region32: #{tpu_custom_call.1} parent=1 // pred_region
      %56 = dma.done [#allocation4], 128
    $region33: #{tpu_custom_call.1} parent=1 // pred_fallthru
      _
    // Predicated region
    $region34: #{tpu_custom_call.1} parent=1 // pred_check
      _
    $region35: #{tpu_custom_call.1} parent=1 // pred_check_branch
      %58 = sbr.rel (0) target = $region37
    $region36: #{tpu_custom_call.1} parent=1 // pred_region
      %60 = dma.done [#allocation7], 256
    $region37: #{tpu_custom_call.1} parent=1 // pred_fallthru
      _
    %v62 = vld [vmem:[%s0] sm:$0x3]
    %v63 = vld [vmem:[#allocation3] sm:$0xf]
    %v64 = vld [vmem:[#allocation3 + $0x4] sm:$0xf]
    %v65 = vld [vmem:[%s2] sm:$0x1]
    %v66 = vpack.c.bf16 %v62, %v62
    %v68 = vperm.slane %v65, 0
    %v72 = vunpack.c.l.b16 %v63
    %v73 = vunpack.c.l.b16 %v64
    %v74 = vpack.c.b16 %v73, %v72
    %vm76 = vcmask 130048
    %v78 = vsel %vm76, %v66, 0
    %80 = vmatpush.bf16.msra.mxu0 0
    %81 = vmatpush.bf16.msra.mxu0 0
    %82 = vmatpush.bf16.msra.mxu0 0
    %83 = vmatpush.bf16.msra.mxu0 0
    %84 = vmatpush.bf16.msra.mxu0 0
    %85 = vmatpush.bf16.msra.mxu0 0
    %86 = vmatpush.bf16.msra.mxu0 0
    %87 = vmatpush.bf16.msra.mxu0 %v74
    %88 = vmatmul.bf16.gmra.mxu0 %v78
    %v89 = vpop.f32.mrf.mxu0
    %v90 = vadd.f32 %v68, %v89
    %v91 = vpop.f32.mrf.mxu0
    %92 = vdwg.mxu0
    %v93 = vmax.f32 %v90, 0.0
    %v94 = vld [vmem:[#allocation6] sm:$0xf]
    %v95 = vld [vmem:[#allocation6 + $0x4] sm:$0xf]
    %v96 = vld [vmem:[#allocation6 + $0x8] sm:$0xf]
    %v97 = vld [vmem:[#allocation6 + $0xc] sm:$0xf]
    %v98 = vld [vmem:[%s4] sm:$0x1]
    %v99 = vpack.c.bf16 %v93, %v93
    %v101 = vperm.slane %v98, 0
    %v107 = vunpack.c.l.b16 %v94
    %v108 = vunpack.c.l.b16 %v95
    %v109 = vunpack.c.l.b16 %v96
    %v110 = vunpack.c.l.b16 %v97
    %v111 = vpack.c.b16 %v108, %v107
    %v112 = vpack.c.b16 %v110, %v109
    %vm115 = vcmask 261120
    %v117 = vsel %vm115, %v99, 0
    %119 = vmatpush.bf16.msra.mxu0 0
    %120 = vmatpush.bf16.msra.mxu0 0
    %121 = vmatpush.bf16.msra.mxu0 0
    %122 = vmatpush.bf16.msra.mxu0 0
    %123 = vmatpush.bf16.msra.mxu0 0
    %124 = vmatpush.bf16.msra.mxu0 0
    %125 = vmatpush.bf16.msra.mxu0 %v112
    %126 = vmatpush.bf16.msra.mxu0 %v111
    %127 = vmatmul.bf16.gmra.mxu0 %v117
    %v128 = vpop.f32.mrf.mxu0
    %v129 = vadd.f32 %v101, %v128
    %v130 = vpop.f32.mrf.mxu0
    %131 = vdwg.mxu0
    %v132 = vmax.f32 %v129, 0.0
    %v133 = vld [vmem:[%s5] sm:$0x1]
    %v134 = vld [vmem:[#allocation2] sm:$0x1]
    %136 = vset.pattern.permute.xlu0 0
    %137 = vperm.xlu0 %136, %v134
    %v138 = vpop.permute.xlu0 %137
    %v140 = vperm.slane %v138, 0
    %v142 = vsel %vm115, %v133, 0
    %v145 = vsel %vm115, %v132, 0
    %147 = vmatpush.xpose.msra.mxu0 0.0
    %148 = vmatpush.xpose.msra.mxu0 0.0
    %149 = vmatpush.xpose.msra.mxu0 0.0
    %150 = vmatpush.xpose.msra.mxu0 0.0
    %151 = vmatpush.xpose.msra.mxu0 0.0
    %152 = vmatpush.xpose.msra.mxu0 0.0
    %153 = vmatpush.xpose.msra.mxu0 0.0
    %154 = vmatpush.xpose.msra.mxu0 0.0
    %155 = vmatpush.xpose.msra.mxu0 0.0
    %156 = vmatpush.xpose.msra.mxu0 0.0
    %157 = vmatpush.xpose.msra.mxu0 0.0
    %158 = vmatpush.xpose.msra.mxu0 0.0
    %159 = vmatpush.xpose.msra.mxu0 0.0
    %160 = vmatpush.xpose.msra.mxu0 0.0
    %161 = vmatpush.xpose.msra.mxu0 0.0
    %162 = vmatpush.xpose.msra.mxu0 %v145
    %163 = vmatmul.f32.gmra.mxu0 %v142
    %v164 = vpop.f32.mrf.mxu0
    %v165 = vadd.f32 %v140, %v164
    %166 = vdwg.mxu0
    %vm167 = vcmask 8192
    %168 = vst.msk [vmem:[#allocation8] sm:$0x1] %vm167, %v165
    // Predicated region
    $region38: #{tpu_custom_call.1} parent=1 // pred_check
      _
    $region39: #{tpu_custom_call.1} parent=1 // pred_check_branch
      %170 = sbr.rel (0) target = $region41
    $region40: #{tpu_custom_call.1} parent=1 // pred_region
      %172 = vsyncadd [#allocation5], 0
      %s174 = sshll.u32 [#allocation8], 4
      %s175 = int_to_ptr.vmem [resolvable:$true] %s174
      %s176 = sshll.u32 %s7, 4
      %s177 = int_to_ptr.hbm [resolvable:$true] %s176
      %179 = dma.vmem_to_hbm [thread:$0]  %s175, 16, %s177, [#allocation5]
    $region41: #{tpu_custom_call.1} parent=1 // pred_fallthru
      _
    // Predicated region
    $region42: #{tpu_custom_call.1} parent=1 // pred_check
      _
    $region43: #{tpu_custom_call.1} parent=1 // pred_check_branch
      %181 = sbr.rel (0) target = $region45
    $region44: #{tpu_custom_call.1} parent=1 // pred_region
      %183 = dma.done [#allocation5], 16
    $region45: #{tpu_custom_call.1} parent=1 // pred_fallthru
      _
    %184 = vsyncpa [#allocation4], 1
    %185 = vsyncpa [#allocation7], 1
    %186 = vsyncpa [#allocation5], 1

</llo_original>
